<compile_context>
chip_gen: v7x
topology: tpu7x:2x2x1
jax: 0.10.0
libtpu: 0.0.40
codegen_flags: <defaults>
</compile_context>

<pallas_src>
import functools

import jax
import jax.numpy as jnp
from jax.experimental import pallas as pl
from jax.experimental.pallas import tpu as pltpu

LANE = 128      # lane (last-dim) granularity
SUBLANE = 8     # sublane (second-to-last dim) granularity


def _round_up(n, m):
    return ((n + m - 1) // m) * m


def _make_fused_mlp_kernel(layer_meta):
    """layer_meta: tuple of (row_offset, K, N) per layer inside the packed slab.

    Slab layout per layer (rows): K rows of w.T  |  1 row of bias  |  pad to 8.
    """
    n_layers = len(layer_meta)

    def kernel(x_ref, p_ref, o_ref):
        y = x_ref[...]
        for i, (off, k, n) in enumerate(layer_meta):
            wt = p_ref[off:off + k, :n]            # [K, N], pre-transposed
            b = p_ref[off + k:off + k + 1, :n]     # [1, N]
            y = jnp.dot(y, wt, preferred_element_type=jnp.float32) + b
            if i != n_layers - 1:                  # ReLU on all but output layer
                y = jnp.maximum(y, 0.0)
        o_ref[...] = y.astype(o_ref.dtype)         # lane-dense (N padded to 128)

    return kernel


def prepare_params(params):
    """Pack pre-transposed weights + biases into ONE padded f32 slab (done once).

    params: list of (w [out_features, in_features], b [out_features]).
    Returns (packed_slab [rows, lane_w], layer_meta).  Zero padding is exact:
    extra lanes of the final layer get zero weight columns + zero bias, hidden
    layers keep their native N (so the next contraction K stays small).
    """
    n_layers = len(params)
    metas = []
    off = 0
    lane_w = 0
    for i, (w, _) in enumerate(params):
        out_f, in_f = w.shape
        n = _round_up(out_f, LANE) if i == n_layers - 1 else out_f
        lane_w = max(lane_w, n)
        metas.append((off, in_f, n))
        off = _round_up(off + in_f + 1, SUBLANE)   # next section sublane-aligned
    lane_w = _round_up(lane_w, LANE)
    total_rows = _round_up(off, SUBLANE)

    packed = jnp.zeros((total_rows, lane_w), jnp.float32)
    for (o, in_f, _), (w, b) in zip(metas, params):
        out_f = w.shape[0]
        packed = packed.at[o:o + in_f, :out_f].set(jnp.asarray(w, jnp.float32).T)
        packed = packed.at[o + in_f, :out_f].set(jnp.asarray(b, jnp.float32))
    return packed, tuple(metas)


def make_mcf_forward(params):
    """Build a cached, jitted forward for MCFmodel with the given parameters."""
    packed, metas = prepare_params(params)
    out_f = params[-1][0].shape[0]
    n_out_pad = metas[-1][2]
    kernel = _make_fused_mlp_kernel(metas)
    vmem = pltpu.MemorySpace.VMEM

    @jax.jit
    def forward(packed_slab, x):
        m = x.shape[0]
        out_pad = pl.pallas_call(
            kernel,
            out_shape=jax.ShapeDtypeStruct((m, n_out_pad), jnp.float32),
            in_specs=[pl.BlockSpec(memory_space=vmem),
                      pl.BlockSpec(memory_space=vmem)],
            out_specs=pl.BlockSpec(memory_space=vmem),
        )(x.astype(jnp.float32), packed_slab)
        # Slice off the lane padding inside the jitted function (fuses, no
        # extra eager dispatch).
        return out_pad[:, :out_f]

    # TODO(synk): if batch/hidden grow large, switch to an M-tiled grid
    # (dimension_semantics=("parallel",) for v7x's two TensorCores, M_tile<=256
    # to keep the fused activation chain in vregs) and bf16-in/f32-accumulate
    # matmuls on v6e/v7x; VMEM-budget tiles against v7x's 64 MiB.
    return functools.partial(forward, packed)


def init_mcf_params(key, in_in, out_out, h_list):
    """Deterministic init mimicking nn.Linear shapes (uniform +/- 1/sqrt(fan_in))."""
    dims = [in_in] + list(h_list) + [out_out]
    params = []
    for i in range(len(dims) - 1):
        fan_in, fan_out = dims[i], dims[i + 1]
        key, kw, kb = jax.random.split(key, 3)
        bound = 1.0 / jnp.sqrt(jnp.float32(fan_in))
        w = jax.random.uniform(kw, (fan_out, fan_in), jnp.float32, -bound, bound)
        b = jax.random.uniform(kb, (fan_out,), jnp.float32, -bound, bound)
        params.append((w, b))
    return params


if __name__ == "__main__":
    # MCFmodel(in_in=16, out_out=4, h_list=[32, 32]), batch=8
    in_in, out_out, h_list = 16, 4, [32, 32]
    batch = 8

    key = jax.random.PRNGKey(0)
    key, kx = jax.random.split(key)
    x = jax.random.normal(kx, (batch, in_in), jnp.float32)

    params = init_mcf_params(jax.random.PRNGKey(0), in_in, out_out, h_list)

    mcf_forward = make_mcf_forward(params)   # weight prep cached at init time
    out = jax.block_until_ready(mcf_forward(x))

    # Pure-JAX reference (same semantics as the PyTorch module).
    y_ref = x
    for i, (w, b) in enumerate(params):
        y_ref = y_ref @ w.T + b
        if i != len(params) - 1:
            y_ref = jnp.maximum(y_ref, 0.0)

    assert out.shape == (batch, out_out)
    assert jnp.allclose(out, y_ref, atol=1e-5, rtol=1e-5)

    print("KERNEL_OK")
</pallas_src>

<mosaic_0001>
module attributes {stable_mosaic.version = 11 : i64} {
  func.func @kernel(%arg0: memref<8x16xf32, #tpu.memory_space<vmem>>, %arg1: memref<104x128xf32, #tpu.memory_space<vmem>>, %arg2: memref<8x128xf32, #tpu.memory_space<vmem>>) attributes {dimension_semantics = [], scalar_prefetch = 0 : i64, scratch_operands = 0 : i64, tpu.core_type = #tpu.core_type<tc>} {
    %c0 = arith.constant 0 : index
    %c0_0 = arith.constant 0 : index
    %0 = vector.load %arg0[%c0, %c0_0] : memref<8x16xf32, #tpu.memory_space<vmem>>, vector<8x16xf32>
    %c0_1 = arith.constant 0 : index
    %c0_2 = arith.constant 0 : index
    %1 = vector.load %arg1[%c0_1, %c0_2] : memref<104x128xf32, #tpu.memory_space<vmem>>, vector<16x32xf32>
    %c16 = arith.constant 16 : index
    %c0_3 = arith.constant 0 : index
    %2 = vector.load %arg1[%c16, %c0_3] : memref<104x128xf32, #tpu.memory_space<vmem>>, vector<1x32xf32>
    %cst = arith.constant dense<0.000000e+00> : vector<8x32xf32>
    %3 = tpu.matmul %0, %1, %cst {dimension_numbers = #tpu.dot_dimension_numbers<[1], [0], [0], [1], [0, 0, 1, 1], [], []>} : vector<8x16xf32>, vector<16x32xf32>, vector<8x32xf32> -> vector<8x32xf32>
    %4 = vector.broadcast %2 : vector<1x32xf32> to vector<8x32xf32>
    %5 = arith.addf %3, %4 : vector<8x32xf32>
    %cst_4 = arith.constant 0.000000e+00 : f32
    %6 = vector.broadcast %cst_4 : f32 to vector<8x32xf32>
    %7 = arith.maximumf %5, %6 : vector<8x32xf32>
    %c24 = arith.constant 24 : index
    %c0_5 = arith.constant 0 : index
    %8 = vector.load %arg1[%c24, %c0_5] : memref<104x128xf32, #tpu.memory_space<vmem>>, vector<32x32xf32>
    %c56 = arith.constant 56 : index
    %c0_6 = arith.constant 0 : index
    %9 = vector.load %arg1[%c56, %c0_6] : memref<104x128xf32, #tpu.memory_space<vmem>>, vector<1x32xf32>
    %cst_7 = arith.constant dense<0.000000e+00> : vector<8x32xf32>
    %10 = tpu.matmul %7, %8, %cst_7 {dimension_numbers = #tpu.dot_dimension_numbers<[1], [0], [0], [1], [0, 0, 1, 1], [], []>} : vector<8x32xf32>, vector<32x32xf32>, vector<8x32xf32> -> vector<8x32xf32>
    %11 = vector.broadcast %9 : vector<1x32xf32> to vector<8x32xf32>
    %12 = arith.addf %10, %11 : vector<8x32xf32>
    %cst_8 = arith.constant 0.000000e+00 : f32
    %13 = vector.broadcast %cst_8 : f32 to vector<8x32xf32>
    %14 = arith.maximumf %12, %13 : vector<8x32xf32>
    %c64 = arith.constant 64 : index
    %c0_9 = arith.constant 0 : index
    %15 = vector.load %arg1[%c64, %c0_9] : memref<104x128xf32, #tpu.memory_space<vmem>>, vector<32x128xf32>
    %c96 = arith.constant 96 : index
    %c0_10 = arith.constant 0 : index
    %16 = vector.load %arg1[%c96, %c0_10] : memref<104x128xf32, #tpu.memory_space<vmem>>, vector<1x128xf32>
    %cst_11 = arith.constant dense<0.000000e+00> : vector<8x128xf32>
    %17 = tpu.matmul %14, %15, %cst_11 {dimension_numbers = #tpu.dot_dimension_numbers<[1], [0], [0], [1], [0, 0, 1, 1], [], []>} : vector<8x32xf32>, vector<32x128xf32>, vector<8x128xf32> -> vector<8x128xf32>
    %18 = vector.broadcast %16 : vector<1x128xf32> to vector<8x128xf32>
    %19 = arith.addf %17, %18 : vector<8x128xf32>
    %c0_12 = arith.constant 0 : index
    %c0_13 = arith.constant 0 : index
    %20 = vector.load %arg2[%c0_12, %c0_13] : memref<8x128xf32, #tpu.memory_space<vmem>>, vector<8x128xf32>
    tpu.vector_store %arg2[%c0_12, %c0_13], %19 {strides = array<i32>} : memref<8x128xf32, #tpu.memory_space<vmem>>, vector<8x128xf32>,
    return
  }
}

</mosaic_0001>

<llo_original>
// kernel: forward.1
$region0: #{forward.1}
  #allocation0 [shape = 'u32[]', space=smem, size = 0x4, offset = 0x4, fixed_abs, tag = 'smem constant byte address 0x4 - core index']
  #allocation1 [shape = 'u32[144,128]{1,0:T(1,128)}', space=vmem, size = 0x12000, scoped, tag = 'internal scratch']
  %s0 = inlined_call_operand.hbm [shape: f32[8,16], index: 0, kind: input, shape index: {}]
  %s1 = inlined_call_operand.hbm [shape: f32[104,128], index: 1, kind: input, shape index: {}]
  %s2 = inlined_call_operand.vmem [shape: f32[8,128], index: 2, kind: output, shape index: {}]
  %s3 = sld [smem:[#allocation0]]
  $region26: #{forward.1} parent=0
    _
  %s5 = ssub.s32 1, %s3
  %s6 = scalar_select 0, %s5, %s3
  $region1: #{forward.1} parent=0
    #allocation2 [shape = 'u8[4096]{0}', space=vmem, size = 0x1000, scoped, tag = 'input window, operand 0, single buffered']
    #allocation3 [shape = 's32[1]{0}', space=sflag, size = 0x4, scoped, tag = 'scoped memory for forward.1']
    #allocation4 [shape = 'u8[53248]{0}', space=vmem, size = 0xd000, scoped, tag = 'input window, operand 1, single buffered']
    #allocation5 [shape = 's32[1]{0}', space=sflag, size = 0x4, scoped, tag = 'scoped memory for forward.1']
    %7 = vsyncpa [#allocation3], 0
    %8 = vsyncpa [#allocation5], 0
    // Predicated region
    $region2: #{forward.1} parent=1 // pred_check
      _
    $region3: #{forward.1} parent=1 // pred_check_branch
      %10 = sbr.rel (0) target = $region5
    $region4: #{forward.1} parent=1 // pred_region
      %s12 = ssub.s32 128, 128
      %13 = vsyncadd [#allocation3], %s12
      %s15 = sshll.u32 [#allocation2], 4
      %s16 = int_to_ptr.vmem [resolvable:$true] %s15
      %18 = dma.hbm_to_vmem [thread:$0]  %s0, 128, %s16, [#allocation3]
    $region5: #{forward.1} parent=1 // pred_fallthru
      _
    // Predicated region
    $region6: #{forward.1} parent=1 // pred_check
      _
    $region7: #{forward.1} parent=1 // pred_check_branch
      %20 = sbr.rel (0) target = $region9
    $region8: #{forward.1} parent=1 // pred_region
      %s22 = ssub.s32 1664, 1664
      %23 = vsyncadd [#allocation5], %s22
      %s24 = sshll.u32 [#allocation4], 4
      %s25 = int_to_ptr.vmem [resolvable:$true] %s24
      %30 = dma.hbm_to_vmem [thread:$0]  %s1, 1664, %s25, [#allocation5], 128, 128, 8
    $region9: #{forward.1} parent=1 // pred_fallthru
      _
    // Predicated region
    $region10: #{forward.1} parent=1 // pred_check
      _
    $region11: #{forward.1} parent=1 // pred_check_branch
      %32 = sbr.rel (0) target = $region13
    $region12: #{forward.1} parent=1 // pred_region
      %33 = dma.done [#allocation3], 128
    $region13: #{forward.1} parent=1 // pred_fallthru
      _
    // Predicated region
    $region14: #{forward.1} parent=1 // pred_check
      _
    $region15: #{forward.1} parent=1 // pred_check_branch
      %35 = sbr.rel (0) target = $region17
    $region16: #{forward.1} parent=1 // pred_region
      %36 = dma.done [#allocation5], 1664
    $region17: #{forward.1} parent=1 // pred_fallthru
      _
    %v37 = vld [vmem:[#allocation2] sm:$0xff]
    %v38 = vld [vmem:[#allocation4] sm:$0xff]
    %v39 = vld [vmem:[#allocation4 + $0x8] sm:$0xff]
    %v40 = vld [vmem:[#allocation4 + $0x10] sm:$0x1]
    %v41 = vlaneseq
    %v42 = vshrl.u32 %v41, 7
    %v43 = vsub.s32 0, %v42
    %v44 = vrot.slane %v40, %v43
    %vm45 = vcmask 130048
    %v47 = vsel %vm45, %v37, 0
    %49 = vmatprep.subr.mxu0 0.0
    %50 = vmatpush1.msra.mxu0 %v38
    %51 = vmatprep.subr.mxu0 0.0
    %52 = vmatpush1.msra.mxu0 %v39
    %53 = vmatprep.subr.mxu0 0.0
    %54 = vmatpush1.msra.mxu0 0.0
    %55 = vmatprep.subr.mxu0 0.0
    %56 = vmatpush1.msra.mxu0 0.0
    %57 = vmatprep.subr.mxu0 0.0
    %58 = vmatpush1.msra.mxu0 0.0
    %59 = vmatprep.subr.mxu0 0.0
    %60 = vmatpush1.msra.mxu0 0.0
    %61 = vmatprep.subr.mxu0 0.0
    %62 = vmatpush1.msra.mxu0 0.0
    %63 = vmatprep.subr.mxu0 0.0
    %64 = vmatpush1.msra.mxu0 0.0
    %65 = vmatprep.subr.mxu0 0.0
    %66 = vmatpush1.msra.mxu0 0.0
    %67 = vmatprep.subr.mxu0 0.0
    %68 = vmatpush1.msra.mxu0 0.0
    %69 = vmatprep.subr.mxu0 0.0
    %70 = vmatpush1.msra.mxu0 0.0
    %71 = vmatprep.subr.mxu0 0.0
    %72 = vmatpush1.msra.mxu0 0.0
    %73 = vmatprep.subr.mxu0 0.0
    %74 = vmatpush1.msra.mxu0 0.0
    %75 = vmatprep.subr.mxu0 0.0
    %76 = vmatpush1.msra.mxu0 0.0
    %77 = vmatprep.subr.mxu0 0.0
    %78 = vmatpush1.msra.mxu0 0.0
    %79 = vmatprep.subr.mxu0 0.0
    %80 = vmatpush1.msra.mxu0 0.0
    %81 = vmatprep.subr.mxu0 0.0
    %82 = vmatpush1.msra.mxu0 0.0
    %83 = vmatprep.subr.mxu0 0.0
    %84 = vmatpush1.msra.mxu0 0.0
    %85 = vmatprep.subr.mxu0 0.0
    %86 = vmatpush1.msra.mxu0 0.0
    %87 = vmatprep.subr.mxu0 0.0
    %88 = vmatpush1.msra.mxu0 0.0
    %89 = vmatprep.subr.mxu0 0.0
    %90 = vmatpush1.msra.mxu0 0.0
    %91 = vmatprep.subr.mxu0 0.0
    %92 = vmatpush1.msra.mxu0 0.0
    %93 = vmatprep.subr.mxu0 0.0
    %94 = vmatpush1.msra.mxu0 0.0
    %95 = vmatprep.subr.mxu0 0.0
    %96 = vmatpush1.msra.mxu0 0.0
    %97 = vmatprep.subr.mxu0 0.0
    %98 = vmatpush1.msra.mxu0 0.0
    %99 = vmatprep.subr.mxu0 0.0
    %100 = vmatpush1.msra.mxu0 0.0
    %101 = vmatprep.subr.mxu0 0.0
    %102 = vmatpush1.msra.mxu0 0.0
    %103 = vmatprep.subr.mxu0 0.0
    %104 = vmatpush1.msra.mxu0 0.0
    %105 = vmatprep.subr.mxu0 0.0
    %106 = vmatpush1.msra.mxu0 0.0
    %107 = vmatprep.subr.mxu0 0.0
    %108 = vmatpush1.msra.mxu0 0.0
    %109 = vmatprep.subr.mxu0 0.0
    %110 = vmatpush1.msra.mxu0 0.0
    %111 = vmatprep.subr.mxu0 0.0
    %112 = vmatpush1.msra.mxu0 0.0
    %113 = vmatprep.mubr.f32.mxu0 0.0
    %114 = vmatmul.mubr.f32.gmra.mrb[0].mxu0 %v47
    %v115 = vpop.f32.mrb[0].mxu0
    %v116 = vadd.f32 %v44, %v115
    %v117 = vpop.f32.mrb[0].mxu0
    %118 = vdwg.mxu0
    %v119 = vmax.f32 %v116, 0.0
    %v120 = vld [vmem:[#allocation4 + $0x18] sm:$0xff]
    %v121 = vld [vmem:[#allocation4 + $0x20] sm:$0xff]
    %v122 = vld [vmem:[#allocation4 + $0x28] sm:$0xff]
    %v123 = vld [vmem:[#allocation4 + $0x30] sm:$0xff]
    %v124 = vld [vmem:[#allocation4 + $0x38] sm:$0x1]
    %v125 = vlaneseq
    %v126 = vshrl.u32 %v125, 7
    %v127 = vsub.s32 0, %v126
    %v128 = vrot.slane %v124, %v127
    %vm129 = vcmask 261120
    %v131 = vsel %vm129, %v119, 0
    %133 = vmatprep.subr.mxu0 0.0
    %134 = vmatpush1.msra.mxu0 %v120
    %135 = vmatprep.subr.mxu0 0.0
    %136 = vmatpush1.msra.mxu0 %v121
    %137 = vmatprep.subr.mxu0 0.0
    %138 = vmatpush1.msra.mxu0 %v122
    %139 = vmatprep.subr.mxu0 0.0
    %140 = vmatpush1.msra.mxu0 %v123
    %141 = vmatprep.subr.mxu0 0.0
    %142 = vmatpush1.msra.mxu0 0.0
    %143 = vmatprep.subr.mxu0 0.0
    %144 = vmatpush1.msra.mxu0 0.0
    %145 = vmatprep.subr.mxu0 0.0
    %146 = vmatpush1.msra.mxu0 0.0
    %147 = vmatprep.subr.mxu0 0.0
    %148 = vmatpush1.msra.mxu0 0.0
    %149 = vmatprep.subr.mxu0 0.0
    %150 = vmatpush1.msra.mxu0 0.0
    %151 = vmatprep.subr.mxu0 0.0
    %152 = vmatpush1.msra.mxu0 0.0
    %153 = vmatprep.subr.mxu0 0.0
    %154 = vmatpush1.msra.mxu0 0.0
    %155 = vmatprep.subr.mxu0 0.0
    %156 = vmatpush1.msra.mxu0 0.0
    %157 = vmatprep.subr.mxu0 0.0
    %158 = vmatpush1.msra.mxu0 0.0
    %159 = vmatprep.subr.mxu0 0.0
    %160 = vmatpush1.msra.mxu0 0.0
    %161 = vmatprep.subr.mxu0 0.0
    %162 = vmatpush1.msra.mxu0 0.0
    %163 = vmatprep.subr.mxu0 0.0
    %164 = vmatpush1.msra.mxu0 0.0
    %165 = vmatprep.subr.mxu0 0.0
    %166 = vmatpush1.msra.mxu0 0.0
    %167 = vmatprep.subr.mxu0 0.0
    %168 = vmatpush1.msra.mxu0 0.0
    %169 = vmatprep.subr.mxu0 0.0
    %170 = vmatpush1.msra.mxu0 0.0
    %171 = vmatprep.subr.mxu0 0.0
    %172 = vmatpush1.msra.mxu0 0.0
    %173 = vmatprep.subr.mxu0 0.0
    %174 = vmatpush1.msra.mxu0 0.0
    %175 = vmatprep.subr.mxu0 0.0
    %176 = vmatpush1.msra.mxu0 0.0
    %177 = vmatprep.subr.mxu0 0.0
    %178 = vmatpush1.msra.mxu0 0.0
    %179 = vmatprep.subr.mxu0 0.0
    %180 = vmatpush1.msra.mxu0 0.0
    %181 = vmatprep.subr.mxu0 0.0
    %182 = vmatpush1.msra.mxu0 0.0
    %183 = vmatprep.subr.mxu0 0.0
    %184 = vmatpush1.msra.mxu0 0.0
    %185 = vmatprep.subr.mxu0 0.0
    %186 = vmatpush1.msra.mxu0 0.0
    %187 = vmatprep.subr.mxu0 0.0
    %188 = vmatpush1.msra.mxu0 0.0
    %189 = vmatprep.subr.mxu0 0.0
    %190 = vmatpush1.msra.mxu0 0.0
    %191 = vmatprep.subr.mxu0 0.0
    %192 = vmatpush1.msra.mxu0 0.0
    %193 = vmatprep.subr.mxu0 0.0
    %194 = vmatpush1.msra.mxu0 0.0
    %195 = vmatprep.subr.mxu0 0.0
    %196 = vmatpush1.msra.mxu0 0.0
    %197 = vmatprep.mubr.f32.mxu0 0.0
    %198 = vmatmul.mubr.f32.gmra.mrb[0].mxu0 %v131
    %v199 = vpop.f32.mrb[0].mxu0
    %v200 = vadd.f32 %v128, %v199
    %v201 = vpop.f32.mrb[0].mxu0
    %202 = vdwg.mxu0
    %v203 = vmax.f32 %v200, 0.0
    %v204 = vld [vmem:[#allocation4 + $0x40] sm:$0xff]
    %v205 = vld [vmem:[#allocation4 + $0x48] sm:$0xff]
    %v206 = vld [vmem:[#allocation4 + $0x50] sm:$0xff]
    %v207 = vld [vmem:[#allocation4 + $0x58] sm:$0xff]
    %v208 = vld [vmem:[#allocation4 + $0x60] sm:$0x1]
    %v209 = vlaneseq
    %v210 = vshrl.u32 %v209, 7
    %v211 = vsub.s32 0, %v210
    %v212 = vrot.slane %v208, %v211
    %v214 = vsel %vm129, %v203, 0
    %216 = vmatprep.subr.mxu0 0.0
    %217 = vmatpush1.msra.mxu0 %v204
    %218 = vmatprep.subr.mxu0 0.0
    %219 = vmatpush1.msra.mxu0 %v205
    %220 = vmatprep.subr.mxu0 0.0
    %221 = vmatpush1.msra.mxu0 %v206
    %222 = vmatprep.subr.mxu0 0.0
    %223 = vmatpush1.msra.mxu0 %v207
    %224 = vmatprep.subr.mxu0 0.0
    %225 = vmatpush1.msra.mxu0 0.0
    %226 = vmatprep.subr.mxu0 0.0
    %227 = vmatpush1.msra.mxu0 0.0
    %228 = vmatprep.subr.mxu0 0.0
    %229 = vmatpush1.msra.mxu0 0.0
    %230 = vmatprep.subr.mxu0 0.0
    %231 = vmatpush1.msra.mxu0 0.0
    %232 = vmatprep.subr.mxu0 0.0
    %233 = vmatpush1.msra.mxu0 0.0
    %234 = vmatprep.subr.mxu0 0.0
    %235 = vmatpush1.msra.mxu0 0.0
    %236 = vmatprep.subr.mxu0 0.0
    %237 = vmatpush1.msra.mxu0 0.0
    %238 = vmatprep.subr.mxu0 0.0
    %239 = vmatpush1.msra.mxu0 0.0
    %240 = vmatprep.subr.mxu0 0.0
    %241 = vmatpush1.msra.mxu0 0.0
    %242 = vmatprep.subr.mxu0 0.0
    %243 = vmatpush1.msra.mxu0 0.0
    %244 = vmatprep.subr.mxu0 0.0
    %245 = vmatpush1.msra.mxu0 0.0
    %246 = vmatprep.subr.mxu0 0.0
    %247 = vmatpush1.msra.mxu0 0.0
    %248 = vmatprep.subr.mxu0 0.0
    %249 = vmatpush1.msra.mxu0 0.0
    %250 = vmatprep.subr.mxu0 0.0
    %251 = vmatpush1.msra.mxu0 0.0
    %252 = vmatprep.subr.mxu0 0.0
    %253 = vmatpush1.msra.mxu0 0.0
    %254 = vmatprep.subr.mxu0 0.0
    %255 = vmatpush1.msra.mxu0 0.0
    %256 = vmatprep.subr.mxu0 0.0
    %257 = vmatpush1.msra.mxu0 0.0
    %258 = vmatprep.subr.mxu0 0.0
    %259 = vmatpush1.msra.mxu0 0.0
    %260 = vmatprep.subr.mxu0 0.0
    %261 = vmatpush1.msra.mxu0 0.0
    %262 = vmatprep.subr.mxu0 0.0
    %263 = vmatpush1.msra.mxu0 0.0
    %264 = vmatprep.subr.mxu0 0.0
    %265 = vmatpush1.msra.mxu0 0.0
    %266 = vmatprep.subr.mxu0 0.0
    %267 = vmatpush1.msra.mxu0 0.0
    %268 = vmatprep.subr.mxu0 0.0
    %269 = vmatpush1.msra.mxu0 0.0
    %270 = vmatprep.subr.mxu0 0.0
    %271 = vmatpush1.msra.mxu0 0.0
    %272 = vmatprep.subr.mxu0 0.0
    %273 = vmatpush1.msra.mxu0 0.0
    %274 = vmatprep.subr.mxu0 0.0
    %275 = vmatpush1.msra.mxu0 0.0
    %276 = vmatprep.subr.mxu0 0.0
    %277 = vmatpush1.msra.mxu0 0.0
    %278 = vmatprep.subr.mxu0 0.0
    %279 = vmatpush1.msra.mxu0 0.0
    %280 = vmatprep.mubr.f32.mxu0 0.0
    %281 = vmatmul.mubr.f32.gmra.mrb[0].mxu0 %v214
    %v282 = vpop.f32.mrb[0].mxu0
    %v283 = vadd.f32 %v212, %v282
    %v284 = vpop.f32.mrb[0].mxu0
    %285 = vdwg.mxu0
    %286 = vst [vmem:[%s2] sm:$0xff] %v283
    // Predicated region
    $region18: #{forward.1} parent=1 // pred_check
      _
    $region19: #{forward.1} parent=1 // pred_check_branch
      %288 = sbr.rel (0) target = $region21
    $region20: #{forward.1} parent=1 // pred_region
      _
    $region21: #{forward.1} parent=1 // pred_fallthru
      _
    // Predicated region
    $region22: #{forward.1} parent=1 // pred_check
      _
    $region23: #{forward.1} parent=1 // pred_check_branch
      %290 = sbr.rel (0) target = $region25
    $region24: #{forward.1} parent=1 // pred_region
      _
    $region25: #{forward.1} parent=1 // pred_fallthru
      _
    %291 = vsyncpa [#allocation3], 1
    %292 = vsyncpa [#allocation5], 1

</llo_original>
